<compile_context>
chip_gen: v7x
topology: tpu7x:2x2x1
jax: 0.10.0
libtpu: 0.0.40
codegen_flags: <defaults>
</compile_context>

<pallas_src>
import functools

import numpy as np
import jax
import jax.numpy as jnp
from jax.experimental import pallas as pl
from jax.experimental.pallas import tpu as pltpu

VOCAB = 5          # A, C, G, T, N  (nn.Embedding(5, input_dim))
_TILE_S_CAP = 2048  # rows per sequence tile (module max_len is 2048; 1 MiB f32 at D=128)
_OUT_BLOCK_BYTES_CAP = 4 * 1024 * 1024  # keep the f32 output block <= ~4 MiB


def _round_up(x: int, m: int) -> int:
    return ((x + m - 1) // m) * m


def _choose_batch_block(B: int, tile_s: int, D: int) -> int:
    """Number of batch rows per grid step (TB).

    Capped so the f32 output block stays <= ~4 MiB (double-buffered VMEM well inside the
    32 MiB scoped default everywhere, incl. v7x). TB is kept layout-friendly for the
    (TB, tile_s) token block: full batch dim, a multiple of 8, or 1.
    """
    cap = max(1, _OUT_BLOCK_BYTES_CAP // (tile_s * D * 4))
    cap = min(cap, 8, B)
    for tb in range(cap, 0, -1):
        if B % tb == 0 and (tb == B or tb % 8 == 0 or tb == 1):
            return tb
    return 1


def _gene_embed_kernel(tok_ref, table_ref, pos_ref, out_ref, *, tb):
    """One grid step handles a (TB batch rows) x (one sequence tile) output block.

    tok_ref  : (TB, TS)     int32  token ids
    table_ref: (V, D)       f32    full embedding table (tiny, stays resident)
    pos_ref  : (TS, D)      f32    positional-encoding tile (reused across the batch)
    out_ref  : (TB, TS, D)  f32    output block
    """
    pos = pos_ref[...]                                        # (TS, D)
    # Hoist the 5 table-row loads (sublane-broadcast rows) out of the batch loop.
    rows = [table_ref[pl.ds(v, 1), :] for v in range(VOCAB)]  # each (1, D)

    for b in range(tb):                                       # static unroll over batch rows
        # Single lane->sublane relayout of this row's token ids.
        tok_col = tok_ref[b, :][:, None]                      # (TS, 1) int32

        # Embedding gather as a chained VPU select (K=5 is far too small for the MXU).
        # Out-of-range ids fall through to the 0.0 init (zero embedding).
        e = jnp.where(tok_col == 0, rows[0], 0.0)             # (TS, D) f32
        for v in range(1, VOCAB):
            e = jnp.where(tok_col == v, rows[v], e)

        # Single fused positional add, then store.
        out_ref[b] = (e + pos).astype(out_ref.dtype)


def make_position_encoding(max_length: int, d_model: int) -> jnp.ndarray:
    """Sinusoidal position encoding, identical to the PyTorch _create_position_encoding."""
    position = jnp.arange(0, max_length, dtype=jnp.float32)[:, None]           # (L, 1)
    div_term = jnp.exp(jnp.arange(0, d_model, 2, dtype=jnp.float32)
                       * -(np.log(10000.0) / d_model))                         # (D/2,)
    pe = jnp.zeros((max_length, d_model), dtype=jnp.float32)
    pe = pe.at[:, 0::2].set(jnp.sin(position * div_term))
    pe = pe.at[:, 1::2].set(jnp.cos(position * div_term))
    return pe                                                                  # (L, D)


def gene_embedding(tokens: jnp.ndarray,
                   emb_table: jnp.ndarray,
                   pos_encoding: jnp.ndarray) -> jnp.ndarray:
    """Forward pass of GeneEmbedding (eval mode: dropout = identity).

    tokens       : (B, S) integer token ids in [0, 5)
    emb_table    : (VOCAB, D) float32
    pos_encoding : (max_len, D) float32
    returns      : (B, S, D) float32
    """
    tokens = tokens.astype(jnp.int32)
    B, S = tokens.shape
    V, D = emb_table.shape
    max_len = pos_encoding.shape[0]
    if S > max_len:
        raise ValueError(f"sequence length {S} exceeds positional-encoding "
                         f"max length {max_len}")

    # ---- tiling ------------------------------------------------------------
    tile_s = min(_TILE_S_CAP, _round_up(S, 128))
    grid_s = pl.cdiv(S, tile_s)
    s_pad = grid_s * tile_s

    tb = _choose_batch_block(B, tile_s, D)
    grid_b = B // tb

    # Pad the sequence tail in the wrapper (bulletproof vs. partial edge blocks).
    tok_in = tokens if s_pad == S else jnp.pad(tokens, ((0, 0), (0, s_pad - S)))
    pos_in = (pos_encoding if s_pad <= max_len
              else jnp.pad(pos_encoding, ((0, s_pad - max_len), (0, 0))))

    out = pl.pallas_call(
        functools.partial(_gene_embed_kernel, tb=tb),
        out_shape=jax.ShapeDtypeStruct((B, s_pad, D), jnp.float32),
        grid_spec=pltpu.PrefetchScalarGridSpec(
            num_scalar_prefetch=0,
            # Sequence-tile axis OUTER, batch INNER: the pos block index is constant
            # across the inner axis, so Pallas fetches each pos tile once per s-tile.
            grid=(grid_s, grid_b),
            in_specs=[
                pl.BlockSpec((tb, tile_s), lambda s, b: (b, s)),   # token block
                pl.BlockSpec((V, D), lambda s, b: (0, 0)),         # table (2.5 KiB, resident)
                pl.BlockSpec((tile_s, D), lambda s, b: (s, 0)),    # pos tile (reused over b)
            ],
            out_specs=pl.BlockSpec((tb, tile_s, D), lambda s, b: (b, s, 0)),
        ),
        compiler_params=pltpu.CompilerParams(
            dimension_semantics=("parallel", "arbitrary")),
    )(tok_in, emb_table, pos_in)

    return out if s_pad == S else out[:, :S, :]


if __name__ == "__main__":
    key = jax.random.PRNGKey(0)
    k_emb, k_tok, k_tok2 = jax.random.split(key, 3)

    D = 128            # input_dim default of the PyTorch module
    MAX_LEN = 2048

    # Deterministic synthetic parameters (nn.Embedding(5, 128).weight analogue).
    emb_table = jax.random.normal(k_emb, (VOCAB, D), dtype=jnp.float32)
    pos_encoding = make_position_encoding(MAX_LEN, D)

    def reference(tokens):
        # gather + pos add; dropout is identity in eval mode
        S = tokens.shape[1]
        return jnp.take(emb_table, tokens, axis=0) + pos_encoding[None, :S, :]

    # 1) Small demo shape -> exercises the sequence-tail padding path (S=16 -> 128-row tile).
    B, S = 2, 16
    tokens = jax.random.randint(k_tok, (B, S), minval=0, maxval=VOCAB, dtype=jnp.int32)
    out = jax.block_until_ready(gene_embedding(tokens, emb_table, pos_encoding))
    assert out.shape == (B, S, D)
    assert jnp.allclose(out, reference(tokens), atol=1e-5, rtol=1e-5)

    # 2) Longer shape -> exact tile, batch-blocked (TB=2) output block.
    B2, S2 = 2, 1536
    tokens2 = jax.random.randint(k_tok2, (B2, S2), minval=0, maxval=VOCAB, dtype=jnp.int32)
    out2 = jax.block_until_ready(gene_embedding(tokens2, emb_table, pos_encoding))
    assert out2.shape == (B2, S2, D)
    assert jnp.allclose(out2, reference(tokens2), atol=1e-5, rtol=1e-5)

    print("KERNEL_OK")
</pallas_src>

<mosaic_0001>
module attributes {stable_mosaic.version = 11 : i64} {
  func.func @_gene_embed_kernel(%arg0: i32, %arg1: i32, %arg2: memref<2x128xi32, #tpu.memory_space<vmem>>, %arg3: memref<5x128xf32, #tpu.memory_space<vmem>>, %arg4: memref<128x128xf32, #tpu.memory_space<vmem>>, %arg5: memref<2x128x128xf32, #tpu.memory_space<vmem>>) attributes {dimension_semantics = [#tpu.dimension_semantics<parallel>, #tpu.dimension_semantics<arbitrary>], iteration_bounds = array<i64: 1, 1>, scalar_prefetch = 0 : i64, scratch_operands = 0 : i64, tpu.core_type = #tpu.core_type<tc>, window_params = [{transform_indices = @transform_0, window_bounds = array<i64: 2, 128>}, {pipeline_mode = #tpu.pipeline_mode<synchronous>, transform_indices = @transform_1, window_bounds = array<i64: 5, 128>}, {transform_indices = @transform_2, window_bounds = array<i64: 128, 128>}, {transform_indices = @transform_3, window_bounds = array<i64: 2, 128, 128>}]} {
    %c0 = arith.constant 0 : index
    %c0_0 = arith.constant 0 : index
    %0 = vector.load %arg4[%c0, %c0_0] : memref<128x128xf32, #tpu.memory_space<vmem>>, vector<128x128xf32>
    %c0_1 = arith.constant 0 : index
    %c0_2 = arith.constant 0 : index
    %1 = vector.load %arg3[%c0_1, %c0_2] : memref<5x128xf32, #tpu.memory_space<vmem>>, vector<1x128xf32>
    %c1 = arith.constant 1 : index
    %c0_3 = arith.constant 0 : index
    %2 = vector.load %arg3[%c1, %c0_3] : memref<5x128xf32, #tpu.memory_space<vmem>>, vector<1x128xf32>
    %c2 = arith.constant 2 : index
    %c0_4 = arith.constant 0 : index
    %3 = vector.load %arg3[%c2, %c0_4] : memref<5x128xf32, #tpu.memory_space<vmem>>, vector<1x128xf32>
    %c3 = arith.constant 3 : index
    %c0_5 = arith.constant 0 : index
    %4 = vector.load %arg3[%c3, %c0_5] : memref<5x128xf32, #tpu.memory_space<vmem>>, vector<1x128xf32>
    %c4 = arith.constant 4 : index
    %c0_6 = arith.constant 0 : index
    %5 = vector.load %arg3[%c4, %c0_6] : memref<5x128xf32, #tpu.memory_space<vmem>>, vector<1x128xf32>
    %c0_7 = arith.constant 0 : index
    %c0_8 = arith.constant 0 : index
    %6 = vector.load %arg2[%c0_7, %c0_8] : memref<2x128xi32, #tpu.memory_space<vmem>>, vector<1x128xi32>
    %7 = vector.shape_cast %6 : vector<1x128xi32> to vector<128xi32>
    %8 = vector.shape_cast %7 : vector<128xi32> to vector<128x1xi32>
    %c0_i32 = arith.constant 0 : i32
    %9 = vector.broadcast %c0_i32 : i32 to vector<128x1xi32>
    %10 = arith.cmpi eq, %8, %9 : vector<128x1xi32>
    %cst = arith.constant 0.000000e+00 : f32
    %11 = vector.shape_cast %10 : vector<128x1xi1> to vector<128x1xi1>
    %12 = vector.broadcast %11 : vector<128x1xi1> to vector<128x128xi1>
    %13 = vector.shape_cast %1 : vector<1x128xf32> to vector<1x128xf32>
    %14 = vector.broadcast %13 : vector<1x128xf32> to vector<128x128xf32>
    %15 = vector.broadcast %cst : f32 to vector<128x128xf32>
    %16 = arith.select %12, %14, %15 : vector<128x128xi1>, vector<128x128xf32>
    %c1_i32 = arith.constant 1 : i32
    %17 = vector.broadcast %c1_i32 : i32 to vector<128x1xi32>
    %18 = arith.cmpi eq, %8, %17 : vector<128x1xi32>
    %19 = vector.shape_cast %18 : vector<128x1xi1> to vector<128x1xi1>
    %20 = vector.broadcast %19 : vector<128x1xi1> to vector<128x128xi1>
    %21 = vector.shape_cast %2 : vector<1x128xf32> to vector<1x128xf32>
    %22 = vector.broadcast %21 : vector<1x128xf32> to vector<128x128xf32>
    %23 = arith.select %20, %22, %16 : vector<128x128xi1>, vector<128x128xf32>
    %c2_i32 = arith.constant 2 : i32
    %24 = vector.broadcast %c2_i32 : i32 to vector<128x1xi32>
    %25 = arith.cmpi eq, %8, %24 : vector<128x1xi32>
    %26 = vector.shape_cast %25 : vector<128x1xi1> to vector<128x1xi1>
    %27 = vector.broadcast %26 : vector<128x1xi1> to vector<128x128xi1>
    %28 = vector.shape_cast %3 : vector<1x128xf32> to vector<1x128xf32>
    %29 = vector.broadcast %28 : vector<1x128xf32> to vector<128x128xf32>
    %30 = arith.select %27, %29, %23 : vector<128x128xi1>, vector<128x128xf32>
    %c3_i32 = arith.constant 3 : i32
    %31 = vector.broadcast %c3_i32 : i32 to vector<128x1xi32>
    %32 = arith.cmpi eq, %8, %31 : vector<128x1xi32>
    %33 = vector.shape_cast %32 : vector<128x1xi1> to vector<128x1xi1>
    %34 = vector.broadcast %33 : vector<128x1xi1> to vector<128x128xi1>
    %35 = vector.shape_cast %4 : vector<1x128xf32> to vector<1x128xf32>
    %36 = vector.broadcast %35 : vector<1x128xf32> to vector<128x128xf32>
    %37 = arith.select %34, %36, %30 : vector<128x128xi1>, vector<128x128xf32>
    %c4_i32 = arith.constant 4 : i32
    %38 = vector.broadcast %c4_i32 : i32 to vector<128x1xi32>
    %39 = arith.cmpi eq, %8, %38 : vector<128x1xi32>
    %40 = vector.shape_cast %39 : vector<128x1xi1> to vector<128x1xi1>
    %41 = vector.broadcast %40 : vector<128x1xi1> to vector<128x128xi1>
    %42 = vector.shape_cast %5 : vector<1x128xf32> to vector<1x128xf32>
    %43 = vector.broadcast %42 : vector<1x128xf32> to vector<128x128xf32>
    %44 = arith.select %41, %43, %37 : vector<128x128xi1>, vector<128x128xf32>
    %45 = arith.addf %44, %0 : vector<128x128xf32>
    %c0_9 = arith.constant 0 : index
    %c0_10 = arith.constant 0 : index
    %c0_11 = arith.constant 0 : index
    %46 = vector.load %arg5[%c0_9, %c0_10, %c0_11] : memref<2x128x128xf32, #tpu.memory_space<vmem>>, vector<1x128x128xf32>
    %47 = vector.shape_cast %46 : vector<1x128x128xf32> to vector<128x128xf32>
    %48 = vector.shape_cast %45 : vector<128x128xf32> to vector<1x128x128xf32>
    tpu.vector_store %arg5[%c0_9, %c0_10, %c0_11], %48 {strides = array<i32>} : memref<2x128x128xf32, #tpu.memory_space<vmem>>, vector<1x128x128xf32>,
    %c1_12 = arith.constant 1 : index
    %c0_13 = arith.constant 0 : index
    %49 = vector.load %arg2[%c1_12, %c0_13] : memref<2x128xi32, #tpu.memory_space<vmem>>, vector<1x128xi32>
    %50 = vector.shape_cast %49 : vector<1x128xi32> to vector<128xi32>
    %51 = vector.shape_cast %50 : vector<128xi32> to vector<128x1xi32>
    %c0_i32_14 = arith.constant 0 : i32
    %52 = vector.broadcast %c0_i32_14 : i32 to vector<128x1xi32>
    %53 = arith.cmpi eq, %51, %52 : vector<128x1xi32>
    %cst_15 = arith.constant 0.000000e+00 : f32
    %54 = vector.shape_cast %53 : vector<128x1xi1> to vector<128x1xi1>
    %55 = vector.broadcast %54 : vector<128x1xi1> to vector<128x128xi1>
    %56 = vector.shape_cast %1 : vector<1x128xf32> to vector<1x128xf32>
    %57 = vector.broadcast %56 : vector<1x128xf32> to vector<128x128xf32>
    %58 = vector.broadcast %cst_15 : f32 to vector<128x128xf32>
    %59 = arith.select %55, %57, %58 : vector<128x128xi1>, vector<128x128xf32>
    %c1_i32_16 = arith.constant 1 : i32
    %60 = vector.broadcast %c1_i32_16 : i32 to vector<128x1xi32>
    %61 = arith.cmpi eq, %51, %60 : vector<128x1xi32>
    %62 = vector.shape_cast %61 : vector<128x1xi1> to vector<128x1xi1>
    %63 = vector.broadcast %62 : vector<128x1xi1> to vector<128x128xi1>
    %64 = vector.shape_cast %2 : vector<1x128xf32> to vector<1x128xf32>
    %65 = vector.broadcast %64 : vector<1x128xf32> to vector<128x128xf32>
    %66 = arith.select %63, %65, %59 : vector<128x128xi1>, vector<128x128xf32>
    %c2_i32_17 = arith.constant 2 : i32
    %67 = vector.broadcast %c2_i32_17 : i32 to vector<128x1xi32>
    %68 = arith.cmpi eq, %51, %67 : vector<128x1xi32>
    %69 = vector.shape_cast %68 : vector<128x1xi1> to vector<128x1xi1>
    %70 = vector.broadcast %69 : vector<128x1xi1> to vector<128x128xi1>
    %71 = vector.shape_cast %3 : vector<1x128xf32> to vector<1x128xf32>
    %72 = vector.broadcast %71 : vector<1x128xf32> to vector<128x128xf32>
    %73 = arith.select %70, %72, %66 : vector<128x128xi1>, vector<128x128xf32>
    %c3_i32_18 = arith.constant 3 : i32
    %74 = vector.broadcast %c3_i32_18 : i32 to vector<128x1xi32>
    %75 = arith.cmpi eq, %51, %74 : vector<128x1xi32>
    %76 = vector.shape_cast %75 : vector<128x1xi1> to vector<128x1xi1>
    %77 = vector.broadcast %76 : vector<128x1xi1> to vector<128x128xi1>
    %78 = vector.shape_cast %4 : vector<1x128xf32> to vector<1x128xf32>
    %79 = vector.broadcast %78 : vector<1x128xf32> to vector<128x128xf32>
    %80 = arith.select %77, %79, %73 : vector<128x128xi1>, vector<128x128xf32>
    %c4_i32_19 = arith.constant 4 : i32
    %81 = vector.broadcast %c4_i32_19 : i32 to vector<128x1xi32>
    %82 = arith.cmpi eq, %51, %81 : vector<128x1xi32>
    %83 = vector.shape_cast %82 : vector<128x1xi1> to vector<128x1xi1>
    %84 = vector.broadcast %83 : vector<128x1xi1> to vector<128x128xi1>
    %85 = vector.shape_cast %5 : vector<1x128xf32> to vector<1x128xf32>
    %86 = vector.broadcast %85 : vector<1x128xf32> to vector<128x128xf32>
    %87 = arith.select %84, %86, %80 : vector<128x128xi1>, vector<128x128xf32>
    %88 = arith.addf %87, %0 : vector<128x128xf32>
    %c1_20 = arith.constant 1 : index
    %c0_21 = arith.constant 0 : index
    %c0_22 = arith.constant 0 : index
    %89 = vector.load %arg5[%c1_20, %c0_21, %c0_22] : memref<2x128x128xf32, #tpu.memory_space<vmem>>, vector<1x128x128xf32>
    %90 = vector.shape_cast %89 : vector<1x128x128xf32> to vector<128x128xf32>
    %91 = vector.shape_cast %88 : vector<128x128xf32> to vector<1x128x128xf32>
    tpu.vector_store %arg5[%c1_20, %c0_21, %c0_22], %91 {strides = array<i32>} : memref<2x128x128xf32, #tpu.memory_space<vmem>>, vector<1x128x128xf32>,
    return
  }
  func.func @transform_0(%arg0: i32, %arg1: i32) -> (i32, i32) {
    %c0_i32 = arith.constant 0 : i32
    return %arg1, %arg0 : i32, i32
  }
  func.func @transform_1(%arg0: i32, %arg1: i32) -> (i32, i32) {
    %c0_i32 = arith.constant 0 : i32
    %c0_i32_0 = arith.constant 0 : i32
    %c0_i32_1 = arith.constant 0 : i32
    return %c0_i32, %c0_i32_0 : i32, i32
  }
  func.func @transform_2(%arg0: i32, %arg1: i32) -> (i32, i32) {
    %c0_i32 = arith.constant 0 : i32
    %c0_i32_0 = arith.constant 0 : i32
    return %arg0, %c0_i32 : i32, i32
  }
  func.func @transform_3(%arg0: i32, %arg1: i32) -> (i32, i32, i32) {
    %c0_i32 = arith.constant 0 : i32
    %c0_i32_0 = arith.constant 0 : i32
    return %arg1, %arg0, %c0_i32 : i32, i32, i32
  }
}

</mosaic_0001>

<llo_original>
// kernel: tpu_custom_call.1
$region0: #{tpu_custom_call.1}
  #allocation0 [shape = 'u32[]', space=smem, size = 0x4, offset = 0x4, fixed_abs, tag = 'smem constant byte address 0x4 - core index']
  #allocation1 [shape = 'u32[144,128]{1,0:T(1,128)}', space=vmem, size = 0x12000, scoped, tag = 'internal scratch']
  %s0 = inlined_call_operand.hbm [shape: s32[2,128], index: 0, kind: input, shape index: {}]
  %s1 = inlined_call_operand.hbm [shape: f32[5,128], index: 1, kind: input, shape index: {}]
  %s2 = inlined_call_operand.hbm [shape: f32[2048,128], index: 2, kind: input, shape index: {}]
  %s3 = inlined_call_operand.hbm [shape: f32[2,128,128], index: 3, kind: output, shape index: {}]
  %s4 = sld [smem:[#allocation0]]
  $region34: #{tpu_custom_call.1} parent=0
    _
  %s6 = ssub.s32 1, %s4
  %s7 = scalar_select 0, %s6, %s4
  $region1: #{tpu_custom_call.1} parent=0
    #allocation2 [shape = 'u8[1024]{0}', space=vmem, size = 0x400, scoped, tag = 'input window, operand 0, single buffered']
    #allocation3 [shape = 's32[1]{0}', space=sflag, size = 0x4, scoped, tag = 'scoped memory for tpu_custom_call.1']
    #allocation4 [shape = 's32[1]{0}', space=sflag, size = 0x4, scoped, tag = 'scoped memory for tpu_custom_call.1']
    #allocation5 [shape = 'u8[4096]{0}', space=vmem, size = 0x1000, scoped, tag = 'input window, operand 1, single buffered']
    #allocation6 [shape = 's32[1]{0}', space=sflag, size = 0x4, scoped, tag = 'scoped memory for tpu_custom_call.1']
    #allocation7 [shape = 'u8[65536]{0}', space=vmem, size = 0x10000, scoped, tag = 'input window, operand 2, single buffered']
    #allocation8 [shape = 'u8[131072]{0}', space=vmem, size = 0x20000, scoped, tag = 'output window, operand 0, single buffered']
    %8 = vsyncpa [#allocation3], 0
    %9 = vsyncpa [#allocation6], 0
    %10 = vsyncpa [#allocation4], 0
    // Predicated region
    $region2: #{tpu_custom_call.1} parent=1 // pred_check
      _
    $region3: #{tpu_custom_call.1} parent=1 // pred_check_branch
      %12 = sbr.rel (0) target = $region5
    $region4: #{tpu_custom_call.1} parent=1 // pred_region
      %s14 = ssub.s32 32, 32
      %15 = vsyncadd [#allocation3], %s14
      %s17 = sshll.u32 [#allocation2], 4
      %s18 = int_to_ptr.vmem [resolvable:$true] %s17
      %20 = dma.hbm_to_vmem [thread:$0]  %s0, 32, %s18, [#allocation3]
    $region5: #{tpu_custom_call.1} parent=1 // pred_fallthru
      _
    // Predicated region
    $region6: #{tpu_custom_call.1} parent=1 // pred_check
      _
    $region7: #{tpu_custom_call.1} parent=1 // pred_check_branch
      %22 = sbr.rel (0) target = $region9
    $region8: #{tpu_custom_call.1} parent=1 // pred_region
      %s24 = ssub.s32 128, 128
      %25 = vsyncadd [#allocation6], %s24
      %s27 = sshll.u32 [#allocation5], 4
      %s28 = int_to_ptr.vmem [resolvable:$true] %s27
      %30 = dma.hbm_to_vmem [thread:$0]  %s1, 128, %s28, [#allocation6]
    $region9: #{tpu_custom_call.1} parent=1 // pred_fallthru
      _
    // Predicated region
    $region10: #{tpu_custom_call.1} parent=1 // pred_check
      _
    $region11: #{tpu_custom_call.1} parent=1 // pred_check_branch
      %32 = sbr.rel (0) target = $region13
    $region12: #{tpu_custom_call.1} parent=1 // pred_region
      %s34 = ssub.s32 2048, 2048
      %35 = vsyncadd [#allocation6], %s34
      %s36 = sshll.u32 [#allocation7], 4
      %s37 = int_to_ptr.vmem [resolvable:$true] %s36
      %42 = dma.hbm_to_vmem [thread:$0]  %s2, 2048, %s37, [#allocation6], 128, 128, 8
    $region13: #{tpu_custom_call.1} parent=1 // pred_fallthru
      _
    // Predicated region
    $region14: #{tpu_custom_call.1} parent=1 // pred_check
      _
    $region15: #{tpu_custom_call.1} parent=1 // pred_check_branch
      %44 = sbr.rel (0) target = $region17
    $region16: #{tpu_custom_call.1} parent=1 // pred_region
      %45 = dma.done [#allocation3], 32
    $region17: #{tpu_custom_call.1} parent=1 // pred_fallthru
      _
    // Predicated region
    $region18: #{tpu_custom_call.1} parent=1 // pred_check
      _
    $region19: #{tpu_custom_call.1} parent=1 // pred_check_branch
      %47 = sbr.rel (0) target = $region21
    $region20: #{tpu_custom_call.1} parent=1 // pred_region
      %48 = dma.done [#allocation6], 128
    $region21: #{tpu_custom_call.1} parent=1 // pred_fallthru
      _
    // Predicated region
    $region22: #{tpu_custom_call.1} parent=1 // pred_check
      _
    $region23: #{tpu_custom_call.1} parent=1 // pred_check_branch
      %50 = sbr.rel (0) target = $region25
    $region24: #{tpu_custom_call.1} parent=1 // pred_region
      %51 = dma.done [#allocation6], 2048
    $region25: #{tpu_custom_call.1} parent=1 // pred_fallthru
      _
    %v52 = vld [vmem:[#allocation7] sm:$0xff]
    %v53 = vld [vmem:[#allocation7 + $0x8] sm:$0xff]
    %v54 = vld [vmem:[#allocation7 + $0x10] sm:$0xff]
    %v55 = vld [vmem:[#allocation7 + $0x18] sm:$0xff]
    %v56 = vld [vmem:[#allocation7 + $0x20] sm:$0xff]
    %v57 = vld [vmem:[#allocation7 + $0x28] sm:$0xff]
    %v58 = vld [vmem:[#allocation7 + $0x30] sm:$0xff]
    %v59 = vld [vmem:[#allocation7 + $0x38] sm:$0xff]
    %v60 = vld [vmem:[#allocation7 + $0x40] sm:$0xff]
    %v61 = vld [vmem:[#allocation7 + $0x48] sm:$0xff]
    %v62 = vld [vmem:[#allocation7 + $0x50] sm:$0xff]
    %v63 = vld [vmem:[#allocation7 + $0x58] sm:$0xff]
    %v64 = vld [vmem:[#allocation7 + $0x60] sm:$0xff]
    %v65 = vld [vmem:[#allocation7 + $0x68] sm:$0xff]
    %v66 = vld [vmem:[#allocation7 + $0x70] sm:$0xff]
    %v67 = vld [vmem:[#allocation7 + $0x78] sm:$0xff]
    %v68 = vld [vmem:[#allocation5] sm:$0x1]
    %v69 = vld [vmem:[#allocation5 + $0x1] sm:$0x1]
    %v70 = vld [vmem:[#allocation5 + $0x2] sm:$0x1]
    %v71 = vld [vmem:[#allocation5 + $0x3] sm:$0x1]
    %v72 = vld [vmem:[#allocation5 + $0x4] sm:$0x1]
    %v73 = vld [vmem:[#allocation2] sm:$0x1]
    %v74 = vlaneseq
    %v75 = vshrl.u32 %v74, 7
    %v76 = vsub.s32 0, %v75
    %v77 = vrot.slane %v73, %v76
    %79 = vbcast.lane.b32.xlu0 %v77, 256
    %v80 = vpop.permute.xlu0 %79
    %s82 = sor.u32 256, 8
    %83 = vbcast.lane.b32.xlu0 %v77, %s82
    %v84 = vpop.permute.xlu0 %83
    %s86 = sor.u32 256, 16
    %87 = vbcast.lane.b32.xlu0 %v77, %s86
    %v88 = vpop.permute.xlu0 %87
    %s90 = sor.u32 256, 24
    %91 = vbcast.lane.b32.xlu0 %v77, %s90
    %v92 = vpop.permute.xlu0 %91
    %s94 = sor.u32 256, 32
    %95 = vbcast.lane.b32.xlu0 %v77, %s94
    %v96 = vpop.permute.xlu0 %95
    %s98 = sor.u32 256, 40
    %99 = vbcast.lane.b32.xlu0 %v77, %s98
    %v100 = vpop.permute.xlu0 %99
    %s102 = sor.u32 256, 48
    %103 = vbcast.lane.b32.xlu0 %v77, %s102
    %v104 = vpop.permute.xlu0 %103
    %s106 = sor.u32 256, 56
    %107 = vbcast.lane.b32.xlu0 %v77, %s106
    %v108 = vpop.permute.xlu0 %107
    %s110 = sor.u32 256, 64
    %111 = vbcast.lane.b32.xlu0 %v77, %s110
    %v112 = vpop.permute.xlu0 %111
    %s114 = sor.u32 256, 72
    %115 = vbcast.lane.b32.xlu0 %v77, %s114
    %v116 = vpop.permute.xlu0 %115
    %s118 = sor.u32 256, 80
    %119 = vbcast.lane.b32.xlu0 %v77, %s118
    %v120 = vpop.permute.xlu0 %119
    %s122 = sor.u32 256, 88
    %123 = vbcast.lane.b32.xlu0 %v77, %s122
    %v124 = vpop.permute.xlu0 %123
    %s126 = sor.u32 256, 96
    %127 = vbcast.lane.b32.xlu0 %v77, %s126
    %v128 = vpop.permute.xlu0 %127
    %s130 = sor.u32 256, 104
    %131 = vbcast.lane.b32.xlu0 %v77, %s130
    %v132 = vpop.permute.xlu0 %131
    %s134 = sor.u32 256, 112
    %135 = vbcast.lane.b32.xlu0 %v77, %s134
    %v136 = vpop.permute.xlu0 %135
    %s138 = sor.u32 256, 120
    %139 = vbcast.lane.b32.xlu0 %v77, %s138
    %v140 = vpop.permute.xlu0 %139
    %vm141 = vcmp.eq.s32.totalorder %v80, 0
    %vm142 = vcmp.eq.s32.totalorder %v84, 0
    %vm143 = vcmp.eq.s32.totalorder %v88, 0
    %vm144 = vcmp.eq.s32.totalorder %v92, 0
    %vm145 = vcmp.eq.s32.totalorder %v96, 0
    %vm146 = vcmp.eq.s32.totalorder %v100, 0
    %vm147 = vcmp.eq.s32.totalorder %v104, 0
    %vm148 = vcmp.eq.s32.totalorder %v108, 0
    %vm149 = vcmp.eq.s32.totalorder %v112, 0
    %vm150 = vcmp.eq.s32.totalorder %v116, 0
    %vm151 = vcmp.eq.s32.totalorder %v120, 0
    %vm152 = vcmp.eq.s32.totalorder %v124, 0
    %vm153 = vcmp.eq.s32.totalorder %v128, 0
    %vm154 = vcmp.eq.s32.totalorder %v132, 0
    %vm155 = vcmp.eq.s32.totalorder %v136, 0
    %vm156 = vcmp.eq.s32.totalorder %v140, 0
    %v157 = vsel %vm141, 1, 0
    %v158 = vsel %vm142, 1, 0
    %v159 = vsel %vm143, 1, 0
    %v160 = vsel %vm144, 1, 0
    %v161 = vsel %vm145, 1, 0
    %v162 = vsel %vm146, 1, 0
    %v163 = vsel %vm147, 1, 0
    %v164 = vsel %vm148, 1, 0
    %v165 = vsel %vm149, 1, 0
    %v166 = vsel %vm150, 1, 0
    %v167 = vsel %vm151, 1, 0
    %v168 = vsel %vm152, 1, 0
    %v169 = vsel %vm153, 1, 0
    %v170 = vsel %vm154, 1, 0
    %v171 = vsel %vm155, 1, 0
    %v172 = vsel %vm156, 1, 0
    %vm173 = vcmp.eq.s32.totalorder %v157, 1
    %vm174 = vcmp.eq.s32.totalorder %v158, 1
    %vm175 = vcmp.eq.s32.totalorder %v159, 1
    %vm176 = vcmp.eq.s32.totalorder %v160, 1
    %vm177 = vcmp.eq.s32.totalorder %v161, 1
    %vm178 = vcmp.eq.s32.totalorder %v162, 1
    %vm179 = vcmp.eq.s32.totalorder %v163, 1
    %vm180 = vcmp.eq.s32.totalorder %v164, 1
    %vm181 = vcmp.eq.s32.totalorder %v165, 1
    %vm182 = vcmp.eq.s32.totalorder %v166, 1
    %vm183 = vcmp.eq.s32.totalorder %v167, 1
    %vm184 = vcmp.eq.s32.totalorder %v168, 1
    %vm185 = vcmp.eq.s32.totalorder %v169, 1
    %vm186 = vcmp.eq.s32.totalorder %v170, 1
    %vm187 = vcmp.eq.s32.totalorder %v171, 1
    %vm188 = vcmp.eq.s32.totalorder %v172, 1
    %v189 = vlaneseq
    %v190 = vshrl.u32 %v189, 7
    %v191 = vsub.s32 0, %v190
    %v192 = vrot.slane %v68, %v191
    %v193 = vsel %vm173, %v192, 0.0
    %v194 = vsel %vm174, %v192, 0.0
    %v195 = vsel %vm175, %v192, 0.0
    %v196 = vsel %vm176, %v192, 0.0
    %v197 = vsel %vm177, %v192, 0.0
    %v198 = vsel %vm178, %v192, 0.0
    %v199 = vsel %vm179, %v192, 0.0
    %v200 = vsel %vm180, %v192, 0.0
    %v201 = vsel %vm181, %v192, 0.0
    %v202 = vsel %vm182, %v192, 0.0
    %v203 = vsel %vm183, %v192, 0.0
    %v204 = vsel %vm184, %v192, 0.0
    %v205 = vsel %vm185, %v192, 0.0
    %v206 = vsel %vm186, %v192, 0.0
    %v207 = vsel %vm187, %v192, 0.0
    %v208 = vsel %vm188, %v192, 0.0
    %vm209 = vcmp.eq.s32.totalorder %v80, 1
    %vm210 = vcmp.eq.s32.totalorder %v84, 1
    %vm211 = vcmp.eq.s32.totalorder %v88, 1
    %vm212 = vcmp.eq.s32.totalorder %v92, 1
    %vm213 = vcmp.eq.s32.totalorder %v96, 1
    %vm214 = vcmp.eq.s32.totalorder %v100, 1
    %vm215 = vcmp.eq.s32.totalorder %v104, 1
    %vm216 = vcmp.eq.s32.totalorder %v108, 1
    %vm217 = vcmp.eq.s32.totalorder %v112, 1
    %vm218 = vcmp.eq.s32.totalorder %v116, 1
    %vm219 = vcmp.eq.s32.totalorder %v120, 1
    %vm220 = vcmp.eq.s32.totalorder %v124, 1
    %vm221 = vcmp.eq.s32.totalorder %v128, 1
    %vm222 = vcmp.eq.s32.totalorder %v132, 1
    %vm223 = vcmp.eq.s32.totalorder %v136, 1
    %vm224 = vcmp.eq.s32.totalorder %v140, 1
    %v225 = vsel %vm209, 1, 0
    %v226 = vsel %vm210, 1, 0
    %v227 = vsel %vm211, 1, 0
    %v228 = vsel %vm212, 1, 0
    %v229 = vsel %vm213, 1, 0
    %v230 = vsel %vm214, 1, 0
    %v231 = vsel %vm215, 1, 0
    %v232 = vsel %vm216, 1, 0
    %v233 = vsel %vm217, 1, 0
    %v234 = vsel %vm218, 1, 0
    %v235 = vsel %vm219, 1, 0
    %v236 = vsel %vm220, 1, 0
    %v237 = vsel %vm221, 1, 0
    %v238 = vsel %vm222, 1, 0
    %v239 = vsel %vm223, 1, 0
    %v240 = vsel %vm224, 1, 0
    %vm241 = vcmp.eq.s32.totalorder %v225, 1
    %vm242 = vcmp.eq.s32.totalorder %v226, 1
    %vm243 = vcmp.eq.s32.totalorder %v227, 1
    %vm244 = vcmp.eq.s32.totalorder %v228, 1
    %vm245 = vcmp.eq.s32.totalorder %v229, 1
    %vm246 = vcmp.eq.s32.totalorder %v230, 1
    %vm247 = vcmp.eq.s32.totalorder %v231, 1
    %vm248 = vcmp.eq.s32.totalorder %v232, 1
    %vm249 = vcmp.eq.s32.totalorder %v233, 1
    %vm250 = vcmp.eq.s32.totalorder %v234, 1
    %vm251 = vcmp.eq.s32.totalorder %v235, 1
    %vm252 = vcmp.eq.s32.totalorder %v236, 1
    %vm253 = vcmp.eq.s32.totalorder %v237, 1
    %vm254 = vcmp.eq.s32.totalorder %v238, 1
    %vm255 = vcmp.eq.s32.totalorder %v239, 1
    %vm256 = vcmp.eq.s32.totalorder %v240, 1
    %v257 = vlaneseq
    %v258 = vshrl.u32 %v257, 7
    %v259 = vsub.s32 0, %v258
    %v260 = vrot.slane %v69, %v259
    %v261 = vsel %vm241, %v260, %v193
    %v262 = vsel %vm242, %v260, %v194
    %v263 = vsel %vm243, %v260, %v195
    %v264 = vsel %vm244, %v260, %v196
    %v265 = vsel %vm245, %v260, %v197
    %v266 = vsel %vm246, %v260, %v198
    %v267 = vsel %vm247, %v260, %v199
    %v268 = vsel %vm248, %v260, %v200
    %v269 = vsel %vm249, %v260, %v201
    %v270 = vsel %vm250, %v260, %v202
    %v271 = vsel %vm251, %v260, %v203
    %v272 = vsel %vm252, %v260, %v204
    %v273 = vsel %vm253, %v260, %v205
    %v274 = vsel %vm254, %v260, %v206
    %v275 = vsel %vm255, %v260, %v207
    %v276 = vsel %vm256, %v260, %v208
    %vm277 = vcmp.eq.s32.totalorder %v80, 2
    %vm278 = vcmp.eq.s32.totalorder %v84, 2
    %vm279 = vcmp.eq.s32.totalorder %v88, 2
    %vm280 = vcmp.eq.s32.totalorder %v92, 2
    %vm281 = vcmp.eq.s32.totalorder %v96, 2
    %vm282 = vcmp.eq.s32.totalorder %v100, 2
    %vm283 = vcmp.eq.s32.totalorder %v104, 2
    %vm284 = vcmp.eq.s32.totalorder %v108, 2
    %vm285 = vcmp.eq.s32.totalorder %v112, 2
    %vm286 = vcmp.eq.s32.totalorder %v116, 2
    %vm287 = vcmp.eq.s32.totalorder %v120, 2
    %vm288 = vcmp.eq.s32.totalorder %v124, 2
    %vm289 = vcmp.eq.s32.totalorder %v128, 2
    %vm290 = vcmp.eq.s32.totalorder %v132, 2
    %vm291 = vcmp.eq.s32.totalorder %v136, 2
    %vm292 = vcmp.eq.s32.totalorder %v140, 2
    %v293 = vsel %vm277, 1, 0
    %v294 = vsel %vm278, 1, 0
    %v295 = vsel %vm279, 1, 0
    %v296 = vsel %vm280, 1, 0
    %v297 = vsel %vm281, 1, 0
    %v298 = vsel %vm282, 1, 0
    %v299 = vsel %vm283, 1, 0
    %v300 = vsel %vm284, 1, 0
    %v301 = vsel %vm285, 1, 0
    %v302 = vsel %vm286, 1, 0
    %v303 = vsel %vm287, 1, 0
    %v304 = vsel %vm288, 1, 0
    %v305 = vsel %vm289, 1, 0
    %v306 = vsel %vm290, 1, 0
    %v307 = vsel %vm291, 1, 0
    %v308 = vsel %vm292, 1, 0
    %vm309 = vcmp.eq.s32.totalorder %v293, 1
    %vm310 = vcmp.eq.s32.totalorder %v294, 1
    %vm311 = vcmp.eq.s32.totalorder %v295, 1
    %vm312 = vcmp.eq.s32.totalorder %v296, 1
    %vm313 = vcmp.eq.s32.totalorder %v297, 1
    %vm314 = vcmp.eq.s32.totalorder %v298, 1
    %vm315 = vcmp.eq.s32.totalorder %v299, 1
    %vm316 = vcmp.eq.s32.totalorder %v300, 1
    %vm317 = vcmp.eq.s32.totalorder %v301, 1
    %vm318 = vcmp.eq.s32.totalorder %v302, 1
    %vm319 = vcmp.eq.s32.totalorder %v303, 1
    %vm320 = vcmp.eq.s32.totalorder %v304, 1
    %vm321 = vcmp.eq.s32.totalorder %v305, 1
    %vm322 = vcmp.eq.s32.totalorder %v306, 1
    %vm323 = vcmp.eq.s32.totalorder %v307, 1
    %vm324 = vcmp.eq.s32.totalorder %v308, 1
    %v325 = vlaneseq
    %v326 = vshrl.u32 %v325, 7
    %v327 = vsub.s32 0, %v326
    %v328 = vrot.slane %v70, %v327
    %v329 = vsel %vm309, %v328, %v261
    %v330 = vsel %vm310, %v328, %v262
    %v331 = vsel %vm311, %v328, %v263
    %v332 = vsel %vm312, %v328, %v264
    %v333 = vsel %vm313, %v328, %v265
    %v334 = vsel %vm314, %v328, %v266
    %v335 = vsel %vm315, %v328, %v267
    %v336 = vsel %vm316, %v328, %v268
    %v337 = vsel %vm317, %v328, %v269
    %v338 = vsel %vm318, %v328, %v270
    %v339 = vsel %vm319, %v328, %v271
    %v340 = vsel %vm320, %v328, %v272
    %v341 = vsel %vm321, %v328, %v273
    %v342 = vsel %vm322, %v328, %v274
    %v343 = vsel %vm323, %v328, %v275
    %v344 = vsel %vm324, %v328, %v276
    %vm345 = vcmp.eq.s32.totalorder %v80, 3
    %vm346 = vcmp.eq.s32.totalorder %v84, 3
    %vm347 = vcmp.eq.s32.totalorder %v88, 3
    %vm348 = vcmp.eq.s32.totalorder %v92, 3
    %vm349 = vcmp.eq.s32.totalorder %v96, 3
    %vm350 = vcmp.eq.s32.totalorder %v100, 3
    %vm351 = vcmp.eq.s32.totalorder %v104, 3
    %vm352 = vcmp.eq.s32.totalorder %v108, 3
    %vm353 = vcmp.eq.s32.totalorder %v112, 3
    %vm354 = vcmp.eq.s32.totalorder %v116, 3
    %vm355 = vcmp.eq.s32.totalorder %v120, 3
    %vm356 = vcmp.eq.s32.totalorder %v124, 3
    %vm357 = vcmp.eq.s32.totalorder %v128, 3
    %vm358 = vcmp.eq.s32.totalorder %v132, 3
    %vm359 = vcmp.eq.s32.totalorder %v136, 3
    %vm360 = vcmp.eq.s32.totalorder %v140, 3
    %v361 = vsel %vm345, 1, 0
    %v362 = vsel %vm346, 1, 0
    %v363 = vsel %vm347, 1, 0
    %v364 = vsel %vm348, 1, 0
    %v365 = vsel %vm349, 1, 0
    %v366 = vsel %vm350, 1, 0
    %v367 = vsel %vm351, 1, 0
    %v368 = vsel %vm352, 1, 0
    %v369 = vsel %vm353, 1, 0
    %v370 = vsel %vm354, 1, 0
    %v371 = vsel %vm355, 1, 0
    %v372 = vsel %vm356, 1, 0
    %v373 = vsel %vm357, 1, 0
    %v374 = vsel %vm358, 1, 0
    %v375 = vsel %vm359, 1, 0
    %v376 = vsel %vm360, 1, 0
    %vm377 = vcmp.eq.s32.totalorder %v361, 1
    %vm378 = vcmp.eq.s32.totalorder %v362, 1
    %vm379 = vcmp.eq.s32.totalorder %v363, 1
    %vm380 = vcmp.eq.s32.totalorder %v364, 1
    %vm381 = vcmp.eq.s32.totalorder %v365, 1
    %vm382 = vcmp.eq.s32.totalorder %v366, 1
    %vm383 = vcmp.eq.s32.totalorder %v367, 1
    %vm384 = vcmp.eq.s32.totalorder %v368, 1
    %vm385 = vcmp.eq.s32.totalorder %v369, 1
    %vm386 = vcmp.eq.s32.totalorder %v370, 1
    %vm387 = vcmp.eq.s32.totalorder %v371, 1
    %vm388 = vcmp.eq.s32.totalorder %v372, 1
    %vm389 = vcmp.eq.s32.totalorder %v373, 1
    %vm390 = vcmp.eq.s32.totalorder %v374, 1
    %vm391 = vcmp.eq.s32.totalorder %v375, 1
    %vm392 = vcmp.eq.s32.totalorder %v376, 1
    %v393 = vlaneseq
    %v394 = vshrl.u32 %v393, 7
    %v395 = vsub.s32 0, %v394
    %v396 = vrot.slane %v71, %v395
    %v397 = vsel %vm377, %v396, %v329
    %v398 = vsel %vm378, %v396, %v330
    %v399 = vsel %vm379, %v396, %v331
    %v400 = vsel %vm380, %v396, %v332
    %v401 = vsel %vm381, %v396, %v333
    %v402 = vsel %vm382, %v396, %v334
    %v403 = vsel %vm383, %v396, %v335
    %v404 = vsel %vm384, %v396, %v336
    %v405 = vsel %vm385, %v396, %v337
    %v406 = vsel %vm386, %v396, %v338
    %v407 = vsel %vm387, %v396, %v339
    %v408 = vsel %vm388, %v396, %v340
    %v409 = vsel %vm389, %v396, %v341
    %v410 = vsel %vm390, %v396, %v342
    %v411 = vsel %vm391, %v396, %v343
    %v412 = vsel %vm392, %v396, %v344
    %vm413 = vcmp.eq.s32.totalorder %v80, 4
    %vm414 = vcmp.eq.s32.totalorder %v84, 4
    %vm415 = vcmp.eq.s32.totalorder %v88, 4
    %vm416 = vcmp.eq.s32.totalorder %v92, 4
    %vm417 = vcmp.eq.s32.totalorder %v96, 4
    %vm418 = vcmp.eq.s32.totalorder %v100, 4
    %vm419 = vcmp.eq.s32.totalorder %v104, 4
    %vm420 = vcmp.eq.s32.totalorder %v108, 4
    %vm421 = vcmp.eq.s32.totalorder %v112, 4
    %vm422 = vcmp.eq.s32.totalorder %v116, 4
    %vm423 = vcmp.eq.s32.totalorder %v120, 4
    %vm424 = vcmp.eq.s32.totalorder %v124, 4
    %vm425 = vcmp.eq.s32.totalorder %v128, 4
    %vm426 = vcmp.eq.s32.totalorder %v132, 4
    %vm427 = vcmp.eq.s32.totalorder %v136, 4
    %vm428 = vcmp.eq.s32.totalorder %v140, 4
    %v429 = vsel %vm413, 1, 0
    %v430 = vsel %vm414, 1, 0
    %v431 = vsel %vm415, 1, 0
    %v432 = vsel %vm416, 1, 0
    %v433 = vsel %vm417, 1, 0
    %v434 = vsel %vm418, 1, 0
    %v435 = vsel %vm419, 1, 0
    %v436 = vsel %vm420, 1, 0
    %v437 = vsel %vm421, 1, 0
    %v438 = vsel %vm422, 1, 0
    %v439 = vsel %vm423, 1, 0
    %v440 = vsel %vm424, 1, 0
    %v441 = vsel %vm425, 1, 0
    %v442 = vsel %vm426, 1, 0
    %v443 = vsel %vm427, 1, 0
    %v444 = vsel %vm428, 1, 0
    %vm445 = vcmp.eq.s32.totalorder %v429, 1
    %vm446 = vcmp.eq.s32.totalorder %v430, 1
    %vm447 = vcmp.eq.s32.totalorder %v431, 1
    %vm448 = vcmp.eq.s32.totalorder %v432, 1
    %vm449 = vcmp.eq.s32.totalorder %v433, 1
    %vm450 = vcmp.eq.s32.totalorder %v434, 1
    %vm451 = vcmp.eq.s32.totalorder %v435, 1
    %vm452 = vcmp.eq.s32.totalorder %v436, 1
    %vm453 = vcmp.eq.s32.totalorder %v437, 1
    %vm454 = vcmp.eq.s32.totalorder %v438, 1
    %vm455 = vcmp.eq.s32.totalorder %v439, 1
    %vm456 = vcmp.eq.s32.totalorder %v440, 1
    %vm457 = vcmp.eq.s32.totalorder %v441, 1
    %vm458 = vcmp.eq.s32.totalorder %v442, 1
    %vm459 = vcmp.eq.s32.totalorder %v443, 1
    %vm460 = vcmp.eq.s32.totalorder %v444, 1
    %v461 = vlaneseq
    %v462 = vshrl.u32 %v461, 7
    %v463 = vsub.s32 0, %v462
    %v464 = vrot.slane %v72, %v463
    %v465 = vsel %vm445, %v464, %v397
    %v466 = vsel %vm446, %v464, %v398
    %v467 = vsel %vm447, %v464, %v399
    %v468 = vsel %vm448, %v464, %v400
    %v469 = vsel %vm449, %v464, %v401
    %v470 = vsel %vm450, %v464, %v402
    %v471 = vsel %vm451, %v464, %v403
    %v472 = vsel %vm452, %v464, %v404
    %v473 = vsel %vm453, %v464, %v405
    %v474 = vsel %vm454, %v464, %v406
    %v475 = vsel %vm455, %v464, %v407
    %v476 = vsel %vm456, %v464, %v408
    %v477 = vsel %vm457, %v464, %v409
    %v478 = vsel %vm458, %v464, %v410
    %v479 = vsel %vm459, %v464, %v411
    %v480 = vsel %vm460, %v464, %v412
    %v481 = vadd.f32 %v465, %v52
    %v482 = vadd.f32 %v466, %v53
    %v483 = vadd.f32 %v467, %v54
    %v484 = vadd.f32 %v468, %v55
    %v485 = vadd.f32 %v469, %v56
    %v486 = vadd.f32 %v470, %v57
    %v487 = vadd.f32 %v471, %v58
    %v488 = vadd.f32 %v472, %v59
    %v489 = vadd.f32 %v473, %v60
    %v490 = vadd.f32 %v474, %v61
    %v491 = vadd.f32 %v475, %v62
    %v492 = vadd.f32 %v476, %v63
    %v493 = vadd.f32 %v477, %v64
    %v494 = vadd.f32 %v478, %v65
    %v495 = vadd.f32 %v479, %v66
    %v496 = vadd.f32 %v480, %v67
    %497 = vst [vmem:[#allocation8] sm:$0xff] %v481
    %498 = vst [vmem:[#allocation8 + $0x8] sm:$0xff] %v482
    %499 = vst [vmem:[#allocation8 + $0x10] sm:$0xff] %v483
    %500 = vst [vmem:[#allocation8 + $0x18] sm:$0xff] %v484
    %501 = vst [vmem:[#allocation8 + $0x20] sm:$0xff] %v485
    %502 = vst [vmem:[#allocation8 + $0x28] sm:$0xff] %v486
    %503 = vst [vmem:[#allocation8 + $0x30] sm:$0xff] %v487
    %504 = vst [vmem:[#allocation8 + $0x38] sm:$0xff] %v488
    %505 = vst [vmem:[#allocation8 + $0x40] sm:$0xff] %v489
    %506 = vst [vmem:[#allocation8 + $0x48] sm:$0xff] %v490
    %507 = vst [vmem:[#allocation8 + $0x50] sm:$0xff] %v491
    %508 = vst [vmem:[#allocation8 + $0x58] sm:$0xff] %v492
    %509 = vst [vmem:[#allocation8 + $0x60] sm:$0xff] %v493
    %510 = vst [vmem:[#allocation8 + $0x68] sm:$0xff] %v494
    %511 = vst [vmem:[#allocation8 + $0x70] sm:$0xff] %v495
    %512 = vst [vmem:[#allocation8 + $0x78] sm:$0xff] %v496
    %v513 = vld [vmem:[#allocation2 + $0x1] sm:$0x1]
    %v514 = vlaneseq
    %v515 = vshrl.u32 %v514, 7
    %v516 = vsub.s32 0, %v515
    %v517 = vrot.slane %v513, %v516
    %519 = vbcast.lane.b32.xlu0 %v517, 256
    %v520 = vpop.permute.xlu0 %519
    %s522 = sor.u32 256, 8
    %523 = vbcast.lane.b32.xlu0 %v517, %s522
    %v524 = vpop.permute.xlu0 %523
    %s526 = sor.u32 256, 16
    %527 = vbcast.lane.b32.xlu0 %v517, %s526
    %v528 = vpop.permute.xlu0 %527
    %s530 = sor.u32 256, 24
    %531 = vbcast.lane.b32.xlu0 %v517, %s530
    %v532 = vpop.permute.xlu0 %531
    %s534 = sor.u32 256, 32
    %535 = vbcast.lane.b32.xlu0 %v517, %s534
    %v536 = vpop.permute.xlu0 %535
    %s538 = sor.u32 256, 40
    %539 = vbcast.lane.b32.xlu0 %v517, %s538
    %v540 = vpop.permute.xlu0 %539
    %s542 = sor.u32 256, 48
    %543 = vbcast.lane.b32.xlu0 %v517, %s542
    %v544 = vpop.permute.xlu0 %543
    %s546 = sor.u32 256, 56
    %547 = vbcast.lane.b32.xlu0 %v517, %s546
    %v548 = vpop.permute.xlu0 %547
    %s550 = sor.u32 256, 64
    %551 = vbcast.lane.b32.xlu0 %v517, %s550
    %v552 = vpop.permute.xlu0 %551
    %s554 = sor.u32 256, 72
    %555 = vbcast.lane.b32.xlu0 %v517, %s554
    %v556 = vpop.permute.xlu0 %555
    %s558 = sor.u32 256, 80
    %559 = vbcast.lane.b32.xlu0 %v517, %s558
    %v560 = vpop.permute.xlu0 %559
    %s562 = sor.u32 256, 88
    %563 = vbcast.lane.b32.xlu0 %v517, %s562
    %v564 = vpop.permute.xlu0 %563
    %s566 = sor.u32 256, 96
    %567 = vbcast.lane.b32.xlu0 %v517, %s566
    %v568 = vpop.permute.xlu0 %567
    %s570 = sor.u32 256, 104
    %571 = vbcast.lane.b32.xlu0 %v517, %s570
    %v572 = vpop.permute.xlu0 %571
    %s574 = sor.u32 256, 112
    %575 = vbcast.lane.b32.xlu0 %v517, %s574
    %v576 = vpop.permute.xlu0 %575
    %s578 = sor.u32 256, 120
    %579 = vbcast.lane.b32.xlu0 %v517, %s578
    %v580 = vpop.permute.xlu0 %579
    %vm581 = vcmp.eq.s32.totalorder %v520, 0
    %vm582 = vcmp.eq.s32.totalorder %v524, 0
    %vm583 = vcmp.eq.s32.totalorder %v528, 0
    %vm584 = vcmp.eq.s32.totalorder %v532, 0
    %vm585 = vcmp.eq.s32.totalorder %v536, 0
    %vm586 = vcmp.eq.s32.totalorder %v540, 0
    %vm587 = vcmp.eq.s32.totalorder %v544, 0
    %vm588 = vcmp.eq.s32.totalorder %v548, 0
    %vm589 = vcmp.eq.s32.totalorder %v552, 0
    %vm590 = vcmp.eq.s32.totalorder %v556, 0
    %vm591 = vcmp.eq.s32.totalorder %v560, 0
    %vm592 = vcmp.eq.s32.totalorder %v564, 0
    %vm593 = vcmp.eq.s32.totalorder %v568, 0
    %vm594 = vcmp.eq.s32.totalorder %v572, 0
    %vm595 = vcmp.eq.s32.totalorder %v576, 0
    %vm596 = vcmp.eq.s32.totalorder %v580, 0
    %v597 = vsel %vm581, 1, 0
    %v598 = vsel %vm582, 1, 0
    %v599 = vsel %vm583, 1, 0
    %v600 = vsel %vm584, 1, 0
    %v601 = vsel %vm585, 1, 0
    %v602 = vsel %vm586, 1, 0
    %v603 = vsel %vm587, 1, 0
    %v604 = vsel %vm588, 1, 0
    %v605 = vsel %vm589, 1, 0
    %v606 = vsel %vm590, 1, 0
    %v607 = vsel %vm591, 1, 0
    %v608 = vsel %vm592, 1, 0
    %v609 = vsel %vm593, 1, 0
    %v610 = vsel %vm594, 1, 0
    %v611 = vsel %vm595, 1, 0
    %v612 = vsel %vm596, 1, 0
    %vm613 = vcmp.eq.s32.totalorder %v597, 1
    %vm614 = vcmp.eq.s32.totalorder %v598, 1
    %vm615 = vcmp.eq.s32.totalorder %v599, 1
    %vm616 = vcmp.eq.s32.totalorder %v600, 1
    %vm617 = vcmp.eq.s32.totalorder %v601, 1
    %vm618 = vcmp.eq.s32.totalorder %v602, 1
    %vm619 = vcmp.eq.s32.totalorder %v603, 1
    %vm620 = vcmp.eq.s32.totalorder %v604, 1
    %vm621 = vcmp.eq.s32.totalorder %v605, 1
    %vm622 = vcmp.eq.s32.totalorder %v606, 1
    %vm623 = vcmp.eq.s32.totalorder %v607, 1
    %vm624 = vcmp.eq.s32.totalorder %v608, 1
    %vm625 = vcmp.eq.s32.totalorder %v609, 1
    %vm626 = vcmp.eq.s32.totalorder %v610, 1
    %vm627 = vcmp.eq.s32.totalorder %v611, 1
    %vm628 = vcmp.eq.s32.totalorder %v612, 1
    %v629 = vsel %vm613, %v192, 0.0
    %v630 = vsel %vm614, %v192, 0.0
    %v631 = vsel %vm615, %v192, 0.0
    %v632 = vsel %vm616, %v192, 0.0
    %v633 = vsel %vm617, %v192, 0.0
    %v634 = vsel %vm618, %v192, 0.0
    %v635 = vsel %vm619, %v192, 0.0
    %v636 = vsel %vm620, %v192, 0.0
    %v637 = vsel %vm621, %v192, 0.0
    %v638 = vsel %vm622, %v192, 0.0
    %v639 = vsel %vm623, %v192, 0.0
    %v640 = vsel %vm624, %v192, 0.0
    %v641 = vsel %vm625, %v192, 0.0
    %v642 = vsel %vm626, %v192, 0.0
    %v643 = vsel %vm627, %v192, 0.0
    %v644 = vsel %vm628, %v192, 0.0
    %vm645 = vcmp.eq.s32.totalorder %v520, 1
    %vm646 = vcmp.eq.s32.totalorder %v524, 1
    %vm647 = vcmp.eq.s32.totalorder %v528, 1
    %vm648 = vcmp.eq.s32.totalorder %v532, 1
    %vm649 = vcmp.eq.s32.totalorder %v536, 1
    %vm650 = vcmp.eq.s32.totalorder %v540, 1
    %vm651 = vcmp.eq.s32.totalorder %v544, 1
    %vm652 = vcmp.eq.s32.totalorder %v548, 1
    %vm653 = vcmp.eq.s32.totalorder %v552, 1
    %vm654 = vcmp.eq.s32.totalorder %v556, 1
    %vm655 = vcmp.eq.s32.totalorder %v560, 1
    %vm656 = vcmp.eq.s32.totalorder %v564, 1
    %vm657 = vcmp.eq.s32.totalorder %v568, 1
    %vm658 = vcmp.eq.s32.totalorder %v572, 1
    %vm659 = vcmp.eq.s32.totalorder %v576, 1
    %vm660 = vcmp.eq.s32.totalorder %v580, 1
    %v661 = vsel %vm645, 1, 0
    %v662 = vsel %vm646, 1, 0
    %v663 = vsel %vm647, 1, 0
    %v664 = vsel %vm648, 1, 0
    %v665 = vsel %vm649, 1, 0
    %v666 = vsel %vm650, 1, 0
    %v667 = vsel %vm651, 1, 0
    %v668 = vsel %vm652, 1, 0
    %v669 = vsel %vm653, 1, 0
    %v670 = vsel %vm654, 1, 0
    %v671 = vsel %vm655, 1, 0
    %v672 = vsel %vm656, 1, 0
    %v673 = vsel %vm657, 1, 0
    %v674 = vsel %vm658, 1, 0
    %v675 = vsel %vm659, 1, 0
    %v676 = vsel %vm660, 1, 0
    %vm677 = vcmp.eq.s32.totalorder %v661, 1
    %vm678 = vcmp.eq.s32.totalorder %v662, 1
    %vm679 = vcmp.eq.s32.totalorder %v663, 1
    %vm680 = vcmp.eq.s32.totalorder %v664, 1
    %vm681 = vcmp.eq.s32.totalorder %v665, 1
    %vm682 = vcmp.eq.s32.totalorder %v666, 1
    %vm683 = vcmp.eq.s32.totalorder %v667, 1
    %vm684 = vcmp.eq.s32.totalorder %v668, 1
    %vm685 = vcmp.eq.s32.totalorder %v669, 1
    %vm686 = vcmp.eq.s32.totalorder %v670, 1
    %vm687 = vcmp.eq.s32.totalorder %v671, 1
    %vm688 = vcmp.eq.s32.totalorder %v672, 1
    %vm689 = vcmp.eq.s32.totalorder %v673, 1
    %vm690 = vcmp.eq.s32.totalorder %v674, 1
    %vm691 = vcmp.eq.s32.totalorder %v675, 1
    %vm692 = vcmp.eq.s32.totalorder %v676, 1
    %v693 = vsel %vm677, %v260, %v629
    %v694 = vsel %vm678, %v260, %v630
    %v695 = vsel %vm679, %v260, %v631
    %v696 = vsel %vm680, %v260, %v632
    %v697 = vsel %vm681, %v260, %v633
    %v698 = vsel %vm682, %v260, %v634
    %v699 = vsel %vm683, %v260, %v635
    %v700 = vsel %vm684, %v260, %v636
    %v701 = vsel %vm685, %v260, %v637
    %v702 = vsel %vm686, %v260, %v638
    %v703 = vsel %vm687, %v260, %v639
    %v704 = vsel %vm688, %v260, %v640
    %v705 = vsel %vm689, %v260, %v641
    %v706 = vsel %vm690, %v260, %v642
    %v707 = vsel %vm691, %v260, %v643
    %v708 = vsel %vm692, %v260, %v644
    %vm709 = vcmp.eq.s32.totalorder %v520, 2
    %vm710 = vcmp.eq.s32.totalorder %v524, 2
    %vm711 = vcmp.eq.s32.totalorder %v528, 2
    %vm712 = vcmp.eq.s32.totalorder %v532, 2
    %vm713 = vcmp.eq.s32.totalorder %v536, 2
    %vm714 = vcmp.eq.s32.totalorder %v540, 2
    %vm715 = vcmp.eq.s32.totalorder %v544, 2
    %vm716 = vcmp.eq.s32.totalorder %v548, 2
    %vm717 = vcmp.eq.s32.totalorder %v552, 2
    %vm718 = vcmp.eq.s32.totalorder %v556, 2
    %vm719 = vcmp.eq.s32.totalorder %v560, 2
    %vm720 = vcmp.eq.s32.totalorder %v564, 2
    %vm721 = vcmp.eq.s32.totalorder %v568, 2
    %vm722 = vcmp.eq.s32.totalorder %v572, 2
    %vm723 = vcmp.eq.s32.totalorder %v576, 2
    %vm724 = vcmp.eq.s32.totalorder %v580, 2
    %v725 = vsel %vm709, 1, 0
    %v726 = vsel %vm710, 1, 0
    %v727 = vsel %vm711, 1, 0
    %v728 = vsel %vm712, 1, 0
    %v729 = vsel %vm713, 1, 0
    %v730 = vsel %vm714, 1, 0
    %v731 = vsel %vm715, 1, 0
    %v732 = vsel %vm716, 1, 0
    %v733 = vsel %vm717, 1, 0
    %v734 = vsel %vm718, 1, 0
    %v735 = vsel %vm719, 1, 0
    %v736 = vsel %vm720, 1, 0
    %v737 = vsel %vm721, 1, 0
    %v738 = vsel %vm722, 1, 0
    %v739 = vsel %vm723, 1, 0
    %v740 = vsel %vm724, 1, 0
    %vm741 = vcmp.eq.s32.totalorder %v725, 1
    %vm742 = vcmp.eq.s32.totalorder %v726, 1
    %vm743 = vcmp.eq.s32.totalorder %v727, 1
    %vm744 = vcmp.eq.s32.totalorder %v728, 1
    %vm745 = vcmp.eq.s32.totalorder %v729, 1
    %vm746 = vcmp.eq.s32.totalorder %v730, 1
    %vm747 = vcmp.eq.s32.totalorder %v731, 1
    %vm748 = vcmp.eq.s32.totalorder %v732, 1
    %vm749 = vcmp.eq.s32.totalorder %v733, 1
    %vm750 = vcmp.eq.s32.totalorder %v734, 1
    %vm751 = vcmp.eq.s32.totalorder %v735, 1
    %vm752 = vcmp.eq.s32.totalorder %v736, 1
    %vm753 = vcmp.eq.s32.totalorder %v737, 1
    %vm754 = vcmp.eq.s32.totalorder %v738, 1
    %vm755 = vcmp.eq.s32.totalorder %v739, 1
    %vm756 = vcmp.eq.s32.totalorder %v740, 1
    %v757 = vsel %vm741, %v328, %v693
    %v758 = vsel %vm742, %v328, %v694
    %v759 = vsel %vm743, %v328, %v695
    %v760 = vsel %vm744, %v328, %v696
    %v761 = vsel %vm745, %v328, %v697
    %v762 = vsel %vm746, %v328, %v698
    %v763 = vsel %vm747, %v328, %v699
    %v764 = vsel %vm748, %v328, %v700
    %v765 = vsel %vm749, %v328, %v701
    %v766 = vsel %vm750, %v328, %v702
    %v767 = vsel %vm751, %v328, %v703
    %v768 = vsel %vm752, %v328, %v704
    %v769 = vsel %vm753, %v328, %v705
    %v770 = vsel %vm754, %v328, %v706
    %v771 = vsel %vm755, %v328, %v707
    %v772 = vsel %vm756, %v328, %v708
    %vm773 = vcmp.eq.s32.totalorder %v520, 3
    %vm774 = vcmp.eq.s32.totalorder %v524, 3
    %vm775 = vcmp.eq.s32.totalorder %v528, 3
    %vm776 = vcmp.eq.s32.totalorder %v532, 3
    %vm777 = vcmp.eq.s32.totalorder %v536, 3
    %vm778 = vcmp.eq.s32.totalorder %v540, 3
    %vm779 = vcmp.eq.s32.totalorder %v544, 3
    %vm780 = vcmp.eq.s32.totalorder %v548, 3
    %vm781 = vcmp.eq.s32.totalorder %v552, 3
    %vm782 = vcmp.eq.s32.totalorder %v556, 3
    %vm783 = vcmp.eq.s32.totalorder %v560, 3
    %vm784 = vcmp.eq.s32.totalorder %v564, 3
    %vm785 = vcmp.eq.s32.totalorder %v568, 3
    %vm786 = vcmp.eq.s32.totalorder %v572, 3
    %vm787 = vcmp.eq.s32.totalorder %v576, 3
    %vm788 = vcmp.eq.s32.totalorder %v580, 3
    %v789 = vsel %vm773, 1, 0
    %v790 = vsel %vm774, 1, 0
    %v791 = vsel %vm775, 1, 0
    %v792 = vsel %vm776, 1, 0
    %v793 = vsel %vm777, 1, 0
    %v794 = vsel %vm778, 1, 0
    %v795 = vsel %vm779, 1, 0
    %v796 = vsel %vm780, 1, 0
    %v797 = vsel %vm781, 1, 0
    %v798 = vsel %vm782, 1, 0
    %v799 = vsel %vm783, 1, 0
    %v800 = vsel %vm784, 1, 0
    %v801 = vsel %vm785, 1, 0
    %v802 = vsel %vm786, 1, 0
    %v803 = vsel %vm787, 1, 0
    %v804 = vsel %vm788, 1, 0
    %vm805 = vcmp.eq.s32.totalorder %v789, 1
    %vm806 = vcmp.eq.s32.totalorder %v790, 1
    %vm807 = vcmp.eq.s32.totalorder %v791, 1
    %vm808 = vcmp.eq.s32.totalorder %v792, 1
    %vm809 = vcmp.eq.s32.totalorder %v793, 1
    %vm810 = vcmp.eq.s32.totalorder %v794, 1
    %vm811 = vcmp.eq.s32.totalorder %v795, 1
    %vm812 = vcmp.eq.s32.totalorder %v796, 1
    %vm813 = vcmp.eq.s32.totalorder %v797, 1
    %vm814 = vcmp.eq.s32.totalorder %v798, 1
    %vm815 = vcmp.eq.s32.totalorder %v799, 1
    %vm816 = vcmp.eq.s32.totalorder %v800, 1
    %vm817 = vcmp.eq.s32.totalorder %v801, 1
    %vm818 = vcmp.eq.s32.totalorder %v802, 1
    %vm819 = vcmp.eq.s32.totalorder %v803, 1
    %vm820 = vcmp.eq.s32.totalorder %v804, 1
    %v821 = vsel %vm805, %v396, %v757
    %v822 = vsel %vm806, %v396, %v758
    %v823 = vsel %vm807, %v396, %v759
    %v824 = vsel %vm808, %v396, %v760
    %v825 = vsel %vm809, %v396, %v761
    %v826 = vsel %vm810, %v396, %v762
    %v827 = vsel %vm811, %v396, %v763
    %v828 = vsel %vm812, %v396, %v764
    %v829 = vsel %vm813, %v396, %v765
    %v830 = vsel %vm814, %v396, %v766
    %v831 = vsel %vm815, %v396, %v767
    %v832 = vsel %vm816, %v396, %v768
    %v833 = vsel %vm817, %v396, %v769
    %v834 = vsel %vm818, %v396, %v770
    %v835 = vsel %vm819, %v396, %v771
    %v836 = vsel %vm820, %v396, %v772
    %vm837 = vcmp.eq.s32.totalorder %v520, 4
    %vm838 = vcmp.eq.s32.totalorder %v524, 4
    %vm839 = vcmp.eq.s32.totalorder %v528, 4
    %vm840 = vcmp.eq.s32.totalorder %v532, 4
    %vm841 = vcmp.eq.s32.totalorder %v536, 4
    %vm842 = vcmp.eq.s32.totalorder %v540, 4
    %vm843 = vcmp.eq.s32.totalorder %v544, 4
    %vm844 = vcmp.eq.s32.totalorder %v548, 4
    %vm845 = vcmp.eq.s32.totalorder %v552, 4
    %vm846 = vcmp.eq.s32.totalorder %v556, 4
    %vm847 = vcmp.eq.s32.totalorder %v560, 4
    %vm848 = vcmp.eq.s32.totalorder %v564, 4
    %vm849 = vcmp.eq.s32.totalorder %v568, 4
    %vm850 = vcmp.eq.s32.totalorder %v572, 4
    %vm851 = vcmp.eq.s32.totalorder %v576, 4
    %vm852 = vcmp.eq.s32.totalorder %v580, 4
    %v853 = vsel %vm837, 1, 0
    %v854 = vsel %vm838, 1, 0
    %v855 = vsel %vm839, 1, 0
    %v856 = vsel %vm840, 1, 0
    %v857 = vsel %vm841, 1, 0
    %v858 = vsel %vm842, 1, 0
    %v859 = vsel %vm843, 1, 0
    %v860 = vsel %vm844, 1, 0
    %v861 = vsel %vm845, 1, 0
    %v862 = vsel %vm846, 1, 0
    %v863 = vsel %vm847, 1, 0
    %v864 = vsel %vm848, 1, 0
    %v865 = vsel %vm849, 1, 0
    %v866 = vsel %vm850, 1, 0
    %v867 = vsel %vm851, 1, 0
    %v868 = vsel %vm852, 1, 0
    %vm869 = vcmp.eq.s32.totalorder %v853, 1
    %vm870 = vcmp.eq.s32.totalorder %v854, 1
    %vm871 = vcmp.eq.s32.totalorder %v855, 1
    %vm872 = vcmp.eq.s32.totalorder %v856, 1
    %vm873 = vcmp.eq.s32.totalorder %v857, 1
    %vm874 = vcmp.eq.s32.totalorder %v858, 1
    %vm875 = vcmp.eq.s32.totalorder %v859, 1
    %vm876 = vcmp.eq.s32.totalorder %v860, 1
    %vm877 = vcmp.eq.s32.totalorder %v861, 1
    %vm878 = vcmp.eq.s32.totalorder %v862, 1
    %vm879 = vcmp.eq.s32.totalorder %v863, 1
    %vm880 = vcmp.eq.s32.totalorder %v864, 1
    %vm881 = vcmp.eq.s32.totalorder %v865, 1
    %vm882 = vcmp.eq.s32.totalorder %v866, 1
    %vm883 = vcmp.eq.s32.totalorder %v867, 1
    %vm884 = vcmp.eq.s32.totalorder %v868, 1
    %v885 = vsel %vm869, %v464, %v821
    %v886 = vsel %vm870, %v464, %v822
    %v887 = vsel %vm871, %v464, %v823
    %v888 = vsel %vm872, %v464, %v824
    %v889 = vsel %vm873, %v464, %v825
    %v890 = vsel %vm874, %v464, %v826
    %v891 = vsel %vm875, %v464, %v827
    %v892 = vsel %vm876, %v464, %v828
    %v893 = vsel %vm877, %v464, %v829
    %v894 = vsel %vm878, %v464, %v830
    %v895 = vsel %vm879, %v464, %v831
    %v896 = vsel %vm880, %v464, %v832
    %v897 = vsel %vm881, %v464, %v833
    %v898 = vsel %vm882, %v464, %v834
    %v899 = vsel %vm883, %v464, %v835
    %v900 = vsel %vm884, %v464, %v836
    %v901 = vadd.f32 %v885, %v52
    %v902 = vadd.f32 %v886, %v53
    %v903 = vadd.f32 %v887, %v54
    %v904 = vadd.f32 %v888, %v55
    %v905 = vadd.f32 %v889, %v56
    %v906 = vadd.f32 %v890, %v57
    %v907 = vadd.f32 %v891, %v58
    %v908 = vadd.f32 %v892, %v59
    %v909 = vadd.f32 %v893, %v60
    %v910 = vadd.f32 %v894, %v61
    %v911 = vadd.f32 %v895, %v62
    %v912 = vadd.f32 %v896, %v63
    %v913 = vadd.f32 %v897, %v64
    %v914 = vadd.f32 %v898, %v65
    %v915 = vadd.f32 %v899, %v66
    %v916 = vadd.f32 %v900, %v67
    %s917 = scalar_lea.vmem [#allocation8], 128
    %918 = vst [vmem:[%s917] sm:$0xff] %v901
    %919 = vst [vmem:[%s917 + $0x8] sm:$0xff] %v902
    %920 = vst [vmem:[%s917 + $0x10] sm:$0xff] %v903
    %921 = vst [vmem:[%s917 + $0x18] sm:$0xff] %v904
    %922 = vst [vmem:[%s917 + $0x20] sm:$0xff] %v905
    %923 = vst [vmem:[%s917 + $0x28] sm:$0xff] %v906
    %924 = vst [vmem:[%s917 + $0x30] sm:$0xff] %v907
    %925 = vst [vmem:[%s917 + $0x38] sm:$0xff] %v908
    %926 = vst [vmem:[%s917 + $0x40] sm:$0xff] %v909
    %927 = vst [vmem:[%s917 + $0x48] sm:$0xff] %v910
    %928 = vst [vmem:[%s917 + $0x50] sm:$0xff] %v911
    %929 = vst [vmem:[%s917 + $0x58] sm:$0xff] %v912
    %930 = vst [vmem:[%s917 + $0x60] sm:$0xff] %v913
    %931 = vst [vmem:[%s917 + $0x68] sm:$0xff] %v914
    %932 = vst [vmem:[%s917 + $0x70] sm:$0xff] %v915
    %933 = vst [vmem:[%s917 + $0x78] sm:$0xff] %v916
    // Predicated region
    $region26: #{tpu_custom_call.1} parent=1 // pred_check
      _
    $region27: #{tpu_custom_call.1} parent=1 // pred_check_branch
      %935 = sbr.rel (0) target = $region29
    $region28: #{tpu_custom_call.1} parent=1 // pred_region
      %s937 = ssub.s32 4096, 4096
      %938 = vsyncadd [#allocation4], %s937
      %s939 = sshll.u32 [#allocation8], 4
      %s940 = int_to_ptr.vmem [resolvable:$true] %s939
      %945 = dma.vmem_to_hbm [thread:$0]  %s940, 4096, %s3, [#allocation4], 128, 128, 8
    $region29: #{tpu_custom_call.1} parent=1 // pred_fallthru
      _
    // Predicated region
    $region30: #{tpu_custom_call.1} parent=1 // pred_check
      _
    $region31: #{tpu_custom_call.1} parent=1 // pred_check_branch
      %947 = sbr.rel (0) target = $region33
    $region32: #{tpu_custom_call.1} parent=1 // pred_region
      %948 = dma.done [#allocation4], 4096
    $region33: #{tpu_custom_call.1} parent=1 // pred_fallthru
      _
    %949 = vsyncpa [#allocation3], 1
    %950 = vsyncpa [#allocation6], 1
    %951 = vsyncpa [#allocation4], 1

</llo_original>
